<compile_context>
chip_gen: v7x
topology: tpu7x:2x2x1
jax: 0.10.0
libtpu: 0.0.40
codegen_flags: <defaults>
</compile_context>

<pallas_src>
import functools

import jax
import jax.numpy as jnp
from jax import lax
from jax.experimental import pallas as pl
from jax.experimental.pallas import tpu as pltpu

R1 = 1e-3
R2 = 1e-3
EPS = 1e-8

_VMEM_SPEC = pl.BlockSpec(memory_space=pltpu.MemorySpace.VMEM)

# dot_general dimension numbers: transpose folded into the MXU operand feed.
_DN_ATB = (((0,), (0,)), ((), ()))   # A^T @ B  (contract rows with rows)
_DN_ABT = (((1,), (1,)), ((), ()))   # A @ B^T  (contract cols with cols)


def _round_up(x, n):
    return ((x + n - 1) // n) * n


def _vmem_capacity_bytes():
    """Physical VMEM per TensorCore; falls back to the v7x 64 MiB floor."""
    try:
        cap = getattr(pltpu.get_tpu_info(), "vmem_capacity_bytes", None)
        if cap:
            return int(cap)
    except Exception:
        pass
    return 64 * 1024 * 1024


# ----------------------------------------------------------------------------
# Kernel 1: streaming covariance accumulation over the sample axis m.
#
# Per grid step (one (TM, o) tile of H1/H2):
#   G11 += H1_t^T H1_t ; G22 += H2_t^T H2_t ; G12 += H1_t^T H2_t
#   s1  += colsum(H1_t) ; s2  += colsum(H2_t)
# Last step (pl.when): S = (G - s^T s / m) / (m - 1)  [+ r on the diagonal].
# Ragged-tail rows (m % tm != 0) are masked to zero in-kernel before the
# matmuls/colsums (Pallas edge blocks are NOT guaranteed zero-filled).
# ----------------------------------------------------------------------------
def _cov_kernel(h1_ref, h2_ref, s11_ref, s22_ref, s12_ref, s1_ref, s2_ref,
                *, m_true, tm, needs_mask):
    i = pl.program_id(0)

    @pl.when(i == 0)
    def _init():
        s11_ref[...] = jnp.zeros_like(s11_ref)
        s22_ref[...] = jnp.zeros_like(s22_ref)
        s12_ref[...] = jnp.zeros_like(s12_ref)
        s1_ref[...] = jnp.zeros_like(s1_ref)
        s2_ref[...] = jnp.zeros_like(s2_ref)

    h1 = h1_ref[...]   # (TM, o); bf16 inputs stay bf16 for the MXU
    h2 = h2_ref[...]
    if needs_mask:     # static Python bool: only emitted when m % tm != 0
        row = lax.broadcasted_iota(jnp.int32, (tm, 1), 0)
        valid = (i * tm + row) < m_true
        h1 = jnp.where(valid, h1, jnp.zeros_like(h1))
        h2 = jnp.where(valid, h2, jnp.zeros_like(h2))

    f32 = jnp.float32
    s11_ref[...] += lax.dot_general(h1, h1, _DN_ATB, preferred_element_type=f32)
    s22_ref[...] += lax.dot_general(h2, h2, _DN_ATB, preferred_element_type=f32)
    s12_ref[...] += lax.dot_general(h1, h2, _DN_ATB, preferred_element_type=f32)
    # Column sums (f32 accumulation). VPU sublane reduce; negligible next to
    # the three MXU Grams / the HBM stream at these tile widths.
    s1_ref[...] += jnp.sum(h1.astype(f32), axis=0, keepdims=True)
    s2_ref[...] += jnp.sum(h2.astype(f32), axis=0, keepdims=True)

    @pl.when(i == pl.num_programs(0) - 1)
    def _finalize():
        o_dim = s11_ref.shape[0]
        scale = jnp.float32(1.0 / (m_true - 1))
        inv_m = jnp.float32(1.0 / m_true)
        s1 = s1_ref[...]
        s2 = s2_ref[...]
        mu1 = s1 * inv_m
        mu2 = s2 * inv_m
        # Outer products via a length-1 contraction: out[i, j] = a[0,i]*b[0,j]
        c11 = lax.dot_general(s1, mu1, _DN_ATB, preferred_element_type=jnp.float32)
        c22 = lax.dot_general(s2, mu2, _DN_ATB, preferred_element_type=jnp.float32)
        c12 = lax.dot_general(s1, mu2, _DN_ATB, preferred_element_type=jnp.float32)
        # Diagonal-only regularization (no full eye materialization / add).
        rowi = lax.broadcasted_iota(jnp.int32, (o_dim, o_dim), 0)
        coli = lax.broadcasted_iota(jnp.int32, (o_dim, o_dim), 1)
        diag = rowi == coli
        g11 = scale * (s11_ref[...] - c11)
        g22 = scale * (s22_ref[...] - c22)
        s11_ref[...] = jnp.where(diag, g11 + jnp.float32(R1), g11)
        s22_ref[...] = jnp.where(diag, g22 + jnp.float32(R2), g22)
        s12_ref[...] = scale * (s12_ref[...] - c12)


def _covariances(h1, h2, tm, vmem_limit_bytes):
    m, o = h1.shape
    grid = (pl.cdiv(m, tm),)
    needs_mask = (m % tm) != 0
    kernel = functools.partial(_cov_kernel, m_true=m, tm=tm,
                               needs_mask=needs_mask)
    out_shape = tuple(jax.ShapeDtypeStruct((o, o), jnp.float32)
                      for _ in range(3))
    return pl.pallas_call(
        kernel,
        out_shape=out_shape,
        grid_spec=pltpu.PrefetchScalarGridSpec(
            num_scalar_prefetch=0,
            grid=grid,
            in_specs=[pl.BlockSpec((tm, o), lambda i: (i, 0)),
                      pl.BlockSpec((tm, o), lambda i: (i, 0))],
            out_specs=(pl.BlockSpec((o, o), lambda i: (0, 0)),
                       pl.BlockSpec((o, o), lambda i: (0, 0)),
                       pl.BlockSpec((o, o), lambda i: (0, 0))),
            scratch_shapes=[pltpu.VMEM((1, o), jnp.float32),
                            pltpu.VMEM((1, o), jnp.float32)]),
        compiler_params=pltpu.CompilerParams(
            dimension_semantics=("arbitrary",),   # m axis is a reduction
            vmem_limit_bytes=int(vmem_limit_bytes)),
    )(h1, h2)


# ----------------------------------------------------------------------------
# Kernel 2 (fused): RootInv11 = (V1*dinv1) V1^T, RootInv22 = (V2*dinv2) V2^T,
#                   T = RootInv11 @ S12 @ RootInv22,  TT = T^T T.
# All intermediates stay in VMEM; single launch, no HBM round trips.
# ----------------------------------------------------------------------------
def _fused_tt_kernel(v1_ref, d1_ref, v2_ref, d2_ref, s12_ref, tt_ref):
    f32 = jnp.float32
    v1 = v1_ref[...]
    v2 = v2_ref[...]
    root11 = lax.dot_general(v1 * d1_ref[...], v1, _DN_ABT,
                             preferred_element_type=f32)
    root22 = lax.dot_general(v2 * d2_ref[...], v2, _DN_ABT,
                             preferred_element_type=f32)
    t = jnp.dot(jnp.dot(root11, s12_ref[...], preferred_element_type=f32),
                root22, preferred_element_type=f32)
    tt_ref[...] = lax.dot_general(t, t, _DN_ATB, preferred_element_type=f32)


def _fused_tt(v1, dinv1, v2, dinv2, s12, vmem_limit_bytes):
    # TODO(synk): for very large o (many (o,o) f32 live buffers exceeding the
    # per-chip VMEM), row-tile T over a 1-D grid with a resident TT accumulator.
    o = s12.shape[0]
    return pl.pallas_call(
        _fused_tt_kernel,
        out_shape=jax.ShapeDtypeStruct((o, o), jnp.float32),
        in_specs=[_VMEM_SPEC] * 5,
        out_specs=_VMEM_SPEC,
        compiler_params=pltpu.CompilerParams(
            vmem_limit_bytes=int(vmem_limit_bytes)),
    )(v1, dinv1, v2, dinv2, s12)


# ----------------------------------------------------------------------------
# Full CCA loss (mirrors CCALoss.forward with H1, H2 of shape (m, o)).
# ----------------------------------------------------------------------------
def cca_loss(h1, h2, outdim_size=10, use_all_singular_values=False):
    m, o = h1.shape
    assert h2.shape == (m, o)
    assert m >= 2
    if not use_all_singular_values and outdim_size > o:
        raise ValueError("outdim_size must be <= feature dim o")

    itemsize = jnp.dtype(h1.dtype).itemsize
    o_lanes = _round_up(o, 128)   # VMEM lane footprint of a streamed tile
    o_sub = _round_up(o, 8)

    # Per-chip VMEM budget: ~96 MiB on 128 MiB parts (v5e/v6e), ~48 MiB on
    # 64 MiB parts (v7x).
    cap = _vmem_capacity_bytes()
    vmem_limit = min(int(cap * 0.75), cap - (8 << 20))

    # Resident footprint inside the covariance kernel: three (o,o) f32 Gram
    # accumulators (counted x2 for output buffering) + two colsum scratch rows.
    acc_bytes = 3 * o_sub * o_lanes * 4 * 2 + 2 * 8 * o_lanes * 4
    per_row_bytes = 2 * 2 * o_lanes * itemsize   # 2 inputs x 2 pipeline buffers
    avail = vmem_limit - acc_bytes - (4 << 20)   # margin for compiler internals
    tm = max(8, min(2048, (avail // per_row_bytes) // 8 * 8))
    tm = min(tm, _round_up(m, 8))

    s11, s22, s12 = _covariances(h1, h2, tm, vmem_limit)

    # Symmetric eigendecomposition has no Pallas equivalent -> plain JAX,
    # run on the true (o, o) covariances (never on padded blocks).
    def _factors(sigma):
        d, v = jnp.linalg.eigh(sigma)
        # eigenpairs with d <= eps are dropped in the torch code; a zeroed
        # inverse-sqrt diagonal is identical: V[:,pos] diag(D[pos]^-1/2) V[:,pos]^T
        dinv = jnp.where(d > EPS, lax.rsqrt(jnp.maximum(d, EPS)), 0.0)
        return v.astype(jnp.float32), dinv.astype(jnp.float32).reshape(1, -1)

    v1, dinv1 = _factors(s11)
    v2, dinv2 = _factors(s22)

    # VMEM limit for the fused kernel: ~10 live (o,o) f32 buffers + margin.
    fused_need = 10 * o_sub * o_lanes * 4 + (4 << 20)
    fused_limit = max(32 << 20, min(fused_need, cap - (8 << 20)))
    tt = _fused_tt(v1, dinv1, v2, dinv2, s12, fused_limit)

    if use_all_singular_values:
        # torch.trace(torch.sqrt(tmp)) is an ELEMENTWISE sqrt then trace.
        corr = jnp.sum(jnp.sqrt(jnp.diagonal(tt)))
    else:
        tt_reg = tt + jnp.float32(R1) * jnp.eye(o, dtype=jnp.float32)
        u = jnp.linalg.eigh(tt_reg)[0]
        u = jnp.where(u > EPS, u, jnp.float32(EPS))
        topu = lax.top_k(u, outdim_size)[0]
        corr = jnp.sum(jnp.sqrt(topu))
    return -corr


if __name__ == "__main__":
    key = jax.random.PRNGKey(0)
    k1, k2 = jax.random.split(key)
    m, o = 32, 16  # m samples, o features per view (outdim_size=10 <= o)
    H1 = jax.random.normal(k1, (m, o), dtype=jnp.float32)
    H2 = jax.random.normal(k2, (m, o), dtype=jnp.float32)

    loss = cca_loss(H1, H2, outdim_size=10, use_all_singular_values=False)
    jax.block_until_ready(loss)

    loss_all = cca_loss(H1, H2, outdim_size=10, use_all_singular_values=True)
    jax.block_until_ready(loss_all)

    print("KERNEL_OK")
</pallas_src>

<mosaic_0001>
module attributes {stable_mosaic.version = 11 : i64} {
  func.func @_cov_kernel(%arg0: i32, %arg1: memref<32x16xf32, #tpu.memory_space<vmem>>, %arg2: memref<32x16xf32, #tpu.memory_space<vmem>>, %arg3: memref<16x16xf32, #tpu.memory_space<vmem>>, %arg4: memref<16x16xf32, #tpu.memory_space<vmem>>, %arg5: memref<16x16xf32, #tpu.memory_space<vmem>>, %arg6: memref<1x16xf32, #tpu.memory_space<vmem>>, %arg7: memref<1x16xf32, #tpu.memory_space<vmem>>) attributes {dimension_semantics = [#tpu.dimension_semantics<arbitrary>], iteration_bounds = array<i64: 1>, scalar_prefetch = 0 : i64, scratch_operands = 2 : i64, tpu.core_type = #tpu.core_type<tc>, window_params = [{transform_indices = @transform_0, window_bounds = array<i64: 32, 16>}, {transform_indices = @transform_1, window_bounds = array<i64: 32, 16>}, {pipeline_mode = #tpu.pipeline_mode<synchronous>, transform_indices = @transform_2, window_bounds = array<i64: 16, 16>}, {pipeline_mode = #tpu.pipeline_mode<synchronous>, transform_indices = @transform_3, window_bounds = array<i64: 16, 16>}, {pipeline_mode = #tpu.pipeline_mode<synchronous>, transform_indices = @transform_4, window_bounds = array<i64: 16, 16>}]} {
    %c0_i32 = arith.constant 0 : i32
    %0 = arith.cmpi eq, %arg0, %c0_i32 : i32
    %1 = arith.extui %0 : i1 to i32
    %c0_i32_0 = arith.constant 0 : i32
    %2 = arith.cmpi ne, %1, %c0_i32_0 : i32
    scf.if %2 {
      %cst_30 = arith.constant 0.000000e+00 : f32
      %30 = vector.broadcast %cst_30 : f32 to vector<16x16xf32>
      %c0_31 = arith.constant 0 : index
      %c0_32 = arith.constant 0 : index
      %31 = vector.load %arg3[%c0_31, %c0_32] : memref<16x16xf32, #tpu.memory_space<vmem>>, vector<16x16xf32>
      tpu.vector_store %arg3[%c0_31, %c0_32], %30 {strides = array<i32>} : memref<16x16xf32, #tpu.memory_space<vmem>>, vector<16x16xf32>,
      %cst_33 = arith.constant 0.000000e+00 : f32
      %32 = vector.broadcast %cst_33 : f32 to vector<16x16xf32>
      %c0_34 = arith.constant 0 : index
      %c0_35 = arith.constant 0 : index
      %33 = vector.load %arg4[%c0_34, %c0_35] : memref<16x16xf32, #tpu.memory_space<vmem>>, vector<16x16xf32>
      tpu.vector_store %arg4[%c0_34, %c0_35], %32 {strides = array<i32>} : memref<16x16xf32, #tpu.memory_space<vmem>>, vector<16x16xf32>,
      %cst_36 = arith.constant 0.000000e+00 : f32
      %34 = vector.broadcast %cst_36 : f32 to vector<16x16xf32>
      %c0_37 = arith.constant 0 : index
      %c0_38 = arith.constant 0 : index
      %35 = vector.load %arg5[%c0_37, %c0_38] : memref<16x16xf32, #tpu.memory_space<vmem>>, vector<16x16xf32>
      tpu.vector_store %arg5[%c0_37, %c0_38], %34 {strides = array<i32>} : memref<16x16xf32, #tpu.memory_space<vmem>>, vector<16x16xf32>,
      %cst_39 = arith.constant 0.000000e+00 : f32
      %36 = vector.broadcast %cst_39 : f32 to vector<1x16xf32>
      %c0_40 = arith.constant 0 : index
      %c0_41 = arith.constant 0 : index
      %37 = vector.load %arg6[%c0_40, %c0_41] : memref<1x16xf32, #tpu.memory_space<vmem>>, vector<1x16xf32>
      tpu.vector_store %arg6[%c0_40, %c0_41], %36 {strides = array<i32>} : memref<1x16xf32, #tpu.memory_space<vmem>>, vector<1x16xf32>,
      %cst_42 = arith.constant 0.000000e+00 : f32
      %38 = vector.broadcast %cst_42 : f32 to vector<1x16xf32>
      %c0_43 = arith.constant 0 : index
      %c0_44 = arith.constant 0 : index
      %39 = vector.load %arg7[%c0_43, %c0_44] : memref<1x16xf32, #tpu.memory_space<vmem>>, vector<1x16xf32>
      tpu.vector_store %arg7[%c0_43, %c0_44], %38 {strides = array<i32>} : memref<1x16xf32, #tpu.memory_space<vmem>>, vector<1x16xf32>,
    } else {
    }
    %c0 = arith.constant 0 : index
    %c0_1 = arith.constant 0 : index
    %3 = vector.load %arg1[%c0, %c0_1] : memref<32x16xf32, #tpu.memory_space<vmem>>, vector<32x16xf32>
    %c0_2 = arith.constant 0 : index
    %c0_3 = arith.constant 0 : index
    %4 = vector.load %arg2[%c0_2, %c0_3] : memref<32x16xf32, #tpu.memory_space<vmem>>, vector<32x16xf32>
    %c0_4 = arith.constant 0 : index
    %c0_5 = arith.constant 0 : index
    %5 = vector.load %arg3[%c0_4, %c0_5] : memref<16x16xf32, #tpu.memory_space<vmem>>, vector<16x16xf32>
    %cst = arith.constant dense<0.000000e+00> : vector<16x16xf32>
    %6 = tpu.matmul %3, %3, %cst {dimension_numbers = #tpu.dot_dimension_numbers<[0], [0], [1], [1], [0, 1, 1, 1], [], []>} : vector<32x16xf32>, vector<32x16xf32>, vector<16x16xf32> -> vector<16x16xf32>
    %7 = arith.addf %5, %6 : vector<16x16xf32>
    %c0_6 = arith.constant 0 : index
    %c0_7 = arith.constant 0 : index
    %8 = vector.load %arg3[%c0_6, %c0_7] : memref<16x16xf32, #tpu.memory_space<vmem>>, vector<16x16xf32>
    tpu.vector_store %arg3[%c0_6, %c0_7], %7 {strides = array<i32>} : memref<16x16xf32, #tpu.memory_space<vmem>>, vector<16x16xf32>,
    %c0_8 = arith.constant 0 : index
    %c0_9 = arith.constant 0 : index
    %9 = vector.load %arg4[%c0_8, %c0_9] : memref<16x16xf32, #tpu.memory_space<vmem>>, vector<16x16xf32>
    %cst_10 = arith.constant dense<0.000000e+00> : vector<16x16xf32>
    %10 = tpu.matmul %4, %4, %cst_10 {dimension_numbers = #tpu.dot_dimension_numbers<[0], [0], [1], [1], [0, 1, 1, 1], [], []>} : vector<32x16xf32>, vector<32x16xf32>, vector<16x16xf32> -> vector<16x16xf32>
    %11 = arith.addf %9, %10 : vector<16x16xf32>
    %c0_11 = arith.constant 0 : index
    %c0_12 = arith.constant 0 : index
    %12 = vector.load %arg4[%c0_11, %c0_12] : memref<16x16xf32, #tpu.memory_space<vmem>>, vector<16x16xf32>
    tpu.vector_store %arg4[%c0_11, %c0_12], %11 {strides = array<i32>} : memref<16x16xf32, #tpu.memory_space<vmem>>, vector<16x16xf32>,
    %c0_13 = arith.constant 0 : index
    %c0_14 = arith.constant 0 : index
    %13 = vector.load %arg5[%c0_13, %c0_14] : memref<16x16xf32, #tpu.memory_space<vmem>>, vector<16x16xf32>
    %cst_15 = arith.constant dense<0.000000e+00> : vector<16x16xf32>
    %14 = tpu.matmul %3, %4, %cst_15 {dimension_numbers = #tpu.dot_dimension_numbers<[0], [0], [1], [1], [0, 1, 1, 1], [], []>} : vector<32x16xf32>, vector<32x16xf32>, vector<16x16xf32> -> vector<16x16xf32>
    %15 = arith.addf %13, %14 : vector<16x16xf32>
    %c0_16 = arith.constant 0 : index
    %c0_17 = arith.constant 0 : index
    %16 = vector.load %arg5[%c0_16, %c0_17] : memref<16x16xf32, #tpu.memory_space<vmem>>, vector<16x16xf32>
    tpu.vector_store %arg5[%c0_16, %c0_17], %15 {strides = array<i32>} : memref<16x16xf32, #tpu.memory_space<vmem>>, vector<16x16xf32>,
    %c0_18 = arith.constant 0 : index
    %c0_19 = arith.constant 0 : index
    %17 = vector.load %arg6[%c0_18, %c0_19] : memref<1x16xf32, #tpu.memory_space<vmem>>, vector<1x16xf32>
    %cst_20 = arith.constant dense<0.000000e+00> : vector<16xf32>
    %18 = vector.multi_reduction <add>, %3, %cst_20 [0] : vector<32x16xf32> to vector<16xf32>
    %19 = vector.shape_cast %18 : vector<16xf32> to vector<1x16xf32>
    %20 = arith.addf %17, %19 : vector<1x16xf32>
    %c0_21 = arith.constant 0 : index
    %c0_22 = arith.constant 0 : index
    %21 = vector.load %arg6[%c0_21, %c0_22] : memref<1x16xf32, #tpu.memory_space<vmem>>, vector<1x16xf32>
    tpu.vector_store %arg6[%c0_21, %c0_22], %20 {strides = array<i32>} : memref<1x16xf32, #tpu.memory_space<vmem>>, vector<1x16xf32>,
    %c0_23 = arith.constant 0 : index
    %c0_24 = arith.constant 0 : index
    %22 = vector.load %arg7[%c0_23, %c0_24] : memref<1x16xf32, #tpu.memory_space<vmem>>, vector<1x16xf32>
    %cst_25 = arith.constant dense<0.000000e+00> : vector<16xf32>
    %23 = vector.multi_reduction <add>, %4, %cst_25 [0] : vector<32x16xf32> to vector<16xf32>
    %24 = vector.shape_cast %23 : vector<16xf32> to vector<1x16xf32>
    %25 = arith.addf %22, %24 : vector<1x16xf32>
    %c0_26 = arith.constant 0 : index
    %c0_27 = arith.constant 0 : index
    %26 = vector.load %arg7[%c0_26, %c0_27] : memref<1x16xf32, #tpu.memory_space<vmem>>, vector<1x16xf32>
    tpu.vector_store %arg7[%c0_26, %c0_27], %25 {strides = array<i32>} : memref<1x16xf32, #tpu.memory_space<vmem>>, vector<1x16xf32>,
    %c0_i32_28 = arith.constant 0 : i32
    %27 = arith.cmpi eq, %arg0, %c0_i32_28 : i32
    %28 = arith.extui %27 : i1 to i32
    %c0_i32_29 = arith.constant 0 : i32
    %29 = arith.cmpi ne, %28, %c0_i32_29 : i32
    scf.if %29 {
      %c0_30 = arith.constant 0 : index
      %c0_31 = arith.constant 0 : index
      %30 = vector.load %arg6[%c0_30, %c0_31] : memref<1x16xf32, #tpu.memory_space<vmem>>, vector<1x16xf32>
      %c0_32 = arith.constant 0 : index
      %c0_33 = arith.constant 0 : index
      %31 = vector.load %arg7[%c0_32, %c0_33] : memref<1x16xf32, #tpu.memory_space<vmem>>, vector<1x16xf32>
      %cst_34 = arith.constant 3.125000e-02 : f32
      %32 = vector.broadcast %cst_34 : f32 to vector<1x16xf32>
      %33 = arith.mulf %30, %32 : vector<1x16xf32>
      %cst_35 = arith.constant 3.125000e-02 : f32
      %34 = vector.broadcast %cst_35 : f32 to vector<1x16xf32>
      %35 = arith.mulf %31, %34 : vector<1x16xf32>
      %cst_36 = arith.constant dense<0.000000e+00> : vector<16x16xf32>
      %36 = tpu.matmul %30, %33, %cst_36 {dimension_numbers = #tpu.dot_dimension_numbers<[0], [0], [1], [1], [0, 1, 1, 1], [], []>} : vector<1x16xf32>, vector<1x16xf32>, vector<16x16xf32> -> vector<16x16xf32>
      %cst_37 = arith.constant dense<0.000000e+00> : vector<16x16xf32>
      %37 = tpu.matmul %31, %35, %cst_37 {dimension_numbers = #tpu.dot_dimension_numbers<[0], [0], [1], [1], [0, 1, 1, 1], [], []>} : vector<1x16xf32>, vector<1x16xf32>, vector<16x16xf32> -> vector<16x16xf32>
      %cst_38 = arith.constant dense<0.000000e+00> : vector<16x16xf32>
      %38 = tpu.matmul %30, %35, %cst_38 {dimension_numbers = #tpu.dot_dimension_numbers<[0], [0], [1], [1], [0, 1, 1, 1], [], []>} : vector<1x16xf32>, vector<1x16xf32>, vector<16x16xf32> -> vector<16x16xf32>
      %39 = tpu.iota {dimensions = array<i32: 0>} : vector<16x16xi32>
      %40 = tpu.iota {dimensions = array<i32: 1>} : vector<16x16xi32>
      %41 = arith.cmpi eq, %39, %40 : vector<16x16xi32>
      %c0_39 = arith.constant 0 : index
      %c0_40 = arith.constant 0 : index
      %42 = vector.load %arg3[%c0_39, %c0_40] : memref<16x16xf32, #tpu.memory_space<vmem>>, vector<16x16xf32>
      %43 = arith.subf %42, %36 : vector<16x16xf32>
      %cst_41 = arith.constant 0.0322580636 : f32
      %44 = vector.broadcast %cst_41 : f32 to vector<16x16xf32>
      %45 = arith.mulf %44, %43 : vector<16x16xf32>
      %c0_42 = arith.constant 0 : index
      %c0_43 = arith.constant 0 : index
      %46 = vector.load %arg4[%c0_42, %c0_43] : memref<16x16xf32, #tpu.memory_space<vmem>>, vector<16x16xf32>
      %47 = arith.subf %46, %37 : vector<16x16xf32>
      %cst_44 = arith.constant 0.0322580636 : f32
      %48 = vector.broadcast %cst_44 : f32 to vector<16x16xf32>
      %49 = arith.mulf %48, %47 : vector<16x16xf32>
      %cst_45 = arith.constant 1.000000e-03 : f32
      %50 = vector.broadcast %cst_45 : f32 to vector<16x16xf32>
      %51 = arith.addf %45, %50 : vector<16x16xf32>
      %52 = arith.select %41, %51, %45 : vector<16x16xi1>, vector<16x16xf32>
      %c0_46 = arith.constant 0 : index
      %c0_47 = arith.constant 0 : index
      %53 = vector.load %arg3[%c0_46, %c0_47] : memref<16x16xf32, #tpu.memory_space<vmem>>, vector<16x16xf32>
      tpu.vector_store %arg3[%c0_46, %c0_47], %52 {strides = array<i32>} : memref<16x16xf32, #tpu.memory_space<vmem>>, vector<16x16xf32>,
      %cst_48 = arith.constant 1.000000e-03 : f32
      %54 = vector.broadcast %cst_48 : f32 to vector<16x16xf32>
      %55 = arith.addf %49, %54 : vector<16x16xf32>
      %56 = arith.select %41, %55, %49 : vector<16x16xi1>, vector<16x16xf32>
      %c0_49 = arith.constant 0 : index
      %c0_50 = arith.constant 0 : index
      %57 = vector.load %arg4[%c0_49, %c0_50] : memref<16x16xf32, #tpu.memory_space<vmem>>, vector<16x16xf32>
      tpu.vector_store %arg4[%c0_49, %c0_50], %56 {strides = array<i32>} : memref<16x16xf32, #tpu.memory_space<vmem>>, vector<16x16xf32>,
      %c0_51 = arith.constant 0 : index
      %c0_52 = arith.constant 0 : index
      %58 = vector.load %arg5[%c0_51, %c0_52] : memref<16x16xf32, #tpu.memory_space<vmem>>, vector<16x16xf32>
      %59 = arith.subf %58, %38 : vector<16x16xf32>
      %cst_53 = arith.constant 0.0322580636 : f32
      %60 = vector.broadcast %cst_53 : f32 to vector<16x16xf32>
      %61 = arith.mulf %60, %59 : vector<16x16xf32>
      %c0_54 = arith.constant 0 : index
      %c0_55 = arith.constant 0 : index
      %62 = vector.load %arg5[%c0_54, %c0_55] : memref<16x16xf32, #tpu.memory_space<vmem>>, vector<16x16xf32>
      tpu.vector_store %arg5[%c0_54, %c0_55], %61 {strides = array<i32>} : memref<16x16xf32, #tpu.memory_space<vmem>>, vector<16x16xf32>,
    } else {
    }
    return
  }
  func.func @transform_0(%arg0: i32) -> (i32, i32) {
    %c0_i32 = arith.constant 0 : i32
    %c0_i32_0 = arith.constant 0 : i32
    return %arg0, %c0_i32 : i32, i32
  }
  func.func @transform_1(%arg0: i32) -> (i32, i32) {
    %c0_i32 = arith.constant 0 : i32
    %c0_i32_0 = arith.constant 0 : i32
    return %arg0, %c0_i32 : i32, i32
  }
  func.func @transform_2(%arg0: i32) -> (i32, i32) {
    %c0_i32 = arith.constant 0 : i32
    %c0_i32_0 = arith.constant 0 : i32
    %c0_i32_1 = arith.constant 0 : i32
    return %c0_i32, %c0_i32_0 : i32, i32
  }
  func.func @transform_3(%arg0: i32) -> (i32, i32) {
    %c0_i32 = arith.constant 0 : i32
    %c0_i32_0 = arith.constant 0 : i32
    %c0_i32_1 = arith.constant 0 : i32
    return %c0_i32, %c0_i32_0 : i32, i32
  }
  func.func @transform_4(%arg0: i32) -> (i32, i32) {
    %c0_i32 = arith.constant 0 : i32
    %c0_i32_0 = arith.constant 0 : i32
    %c0_i32_1 = arith.constant 0 : i32
    return %c0_i32, %c0_i32_0 : i32, i32
  }
}

</mosaic_0001>

<llo_original>
// kernel: tpu_custom_call.1
$region0: #{tpu_custom_call.1}
  #allocation0 [shape = 'u32[]', space=smem, size = 0x4, offset = 0x4, fixed_abs, tag = 'smem constant byte address 0x4 - core index']
  #allocation1 [shape = 'u32[144,128]{1,0:T(1,128)}', space=vmem, size = 0x12000, scoped, tag = 'internal scratch']
  #allocation2 [shape = 'f32[1,16]{1,0:T(1,128)}', space=vmem, size = 0x200, scoped, tag = 'scratch operand']
  #allocation3 [shape = 'f32[1,16]{1,0:T(1,128)}', space=vmem, size = 0x200, scoped, tag = 'scratch operand']
  %s0 = inlined_call_operand.vmem [shape: f32[32,16], index: 0, kind: input, shape index: {}]
  %s1 = inlined_call_operand.vmem [shape: f32[32,16], index: 1, kind: input, shape index: {}]
  %s2 = inlined_call_operand.hbm [shape: f32[16,16], index: 2, kind: output, shape index: {0}]
  %s3 = inlined_call_operand.hbm [shape: f32[16,16], index: 3, kind: output, shape index: {1}]
  %s4 = inlined_call_operand.hbm [shape: f32[16,16], index: 4, kind: output, shape index: {2}]
  %5 = xla_tuple %s2, %s3, %s4
  %s6 = sld [smem:[#allocation0]]
  $region42: #{tpu_custom_call.1} parent=0
    _
  %s8 = ssub.s32 1, %s6
  %s9 = scalar_select 0, %s8, %s6
  $region1: #{tpu_custom_call.1} parent=0
    #allocation4 [shape = 'u8[8192]{0}', space=vmem, size = 0x2000, scoped, tag = 'output window, operand 0, single buffered']
    #allocation5 [shape = 's32[1]{0}', space=sflag, size = 0x4, scoped, tag = 'scoped memory for tpu_custom_call.1']
    #allocation6 [shape = 'u8[8192]{0}', space=vmem, size = 0x2000, scoped, tag = 'output window, operand 1, single buffered']
    #allocation7 [shape = 's32[1]{0}', space=sflag, size = 0x4, scoped, tag = 'scoped memory for tpu_custom_call.1']
    #allocation8 [shape = 'u8[8192]{0}', space=vmem, size = 0x2000, scoped, tag = 'output window, operand 2, single buffered']
    %10 = vsyncpa [#allocation5], 0
    %11 = vsyncpa [#allocation7], 0
    // Predicated region
    $region2: #{tpu_custom_call.1} parent=1 // pred_check
      _
    $region3: #{tpu_custom_call.1} parent=1 // pred_check_branch
      %13 = sbr.rel (0) target = $region5
    $region4: #{tpu_custom_call.1} parent=1 // pred_region
      _
    $region5: #{tpu_custom_call.1} parent=1 // pred_fallthru
      _
    // Predicated region
    $region6: #{tpu_custom_call.1} parent=1 // pred_check
      _
    $region7: #{tpu_custom_call.1} parent=1 // pred_check_branch
      %15 = sbr.rel (0) target = $region9
    $region8: #{tpu_custom_call.1} parent=1 // pred_region
      _
    $region9: #{tpu_custom_call.1} parent=1 // pred_fallthru
      _
    %p16 = scmp.eq.s32.totalorder 0, 0
    // Predicated region
    $region10: #{tpu_custom_call.1} parent=1 // pred_check
      %p17 = pneg %p16
    $region11: #{tpu_custom_call.1} parent=1 // pred_check_branch
      %19 = sbr.rel (%p17) target = $region13
    $region12: #{tpu_custom_call.1} parent=1 // pred_region
      %vm20 = vcmask 130048
      %21 = vst.msk [vmem:[#allocation4] sm:$0xff] %vm20, 0.0
      %22 = vst.msk [vmem:[#allocation4 + $0x8] sm:$0xff] %vm20, 0.0
      %23 = vst.msk [vmem:[#allocation6] sm:$0xff] %vm20, 0.0
      %24 = vst.msk [vmem:[#allocation6 + $0x8] sm:$0xff] %vm20, 0.0
      %25 = vst.msk [vmem:[#allocation8] sm:$0xff] %vm20, 0.0
      %26 = vst.msk [vmem:[#allocation8 + $0x8] sm:$0xff] %vm20, 0.0
      %vm27 = vcmask 122880
      %28 = vst.msk [vmem:[#allocation2] sm:$0x1] %vm27, 0.0
      %29 = vst.msk [vmem:[#allocation3] sm:$0x1] %vm27, 0.0
    $region13: #{tpu_custom_call.1} parent=1 // pred_fallthru
      _
    %v30 = vld [vmem:[%s0] sm:$0xff]
    %v31 = vld [vmem:[%s0 + $0x8] sm:$0xff]
    %v32 = vld [vmem:[%s0 + $0x10] sm:$0xff]
    %v33 = vld [vmem:[%s0 + $0x18] sm:$0xff]
    %v34 = vld [vmem:[%s1] sm:$0xff]
    %v35 = vld [vmem:[%s1 + $0x8] sm:$0xff]
    %v36 = vld [vmem:[%s1 + $0x10] sm:$0xff]
    %v37 = vld [vmem:[%s1 + $0x18] sm:$0xff]
    %v38 = vld [vmem:[#allocation4] sm:$0xff]
    %v39 = vld [vmem:[#allocation4 + $0x8] sm:$0xff]
    %40 = vxpose.xlu0.b32.start [1/16] %v30, 128
    %41 = vxpose.xlu0.b32.cont [2/16] %v31, 128
    %42 = vxpose.xlu0.b32.cont [3/16] %v32, 128
    %43 = vxpose.xlu0.b32.cont [4/16] %v33, 128
    %44 = vxpose.xlu0.b32.cont [5/16] 0.0, 128
    %45 = vxpose.xlu0.b32.cont [6/16] 0.0, 128
    %46 = vxpose.xlu0.b32.cont [7/16] 0.0, 128
    %47 = vxpose.xlu0.b32.cont [8/16] 0.0, 128
    %48 = vxpose.xlu0.b32.cont [9/16] 0.0, 128
    %49 = vxpose.xlu0.b32.cont [10/16] 0.0, 128
    %50 = vxpose.xlu0.b32.cont [11/16] 0.0, 128
    %51 = vxpose.xlu0.b32.cont [12/16] 0.0, 128
    %52 = vxpose.xlu0.b32.cont [13/16] 0.0, 128
    %53 = vxpose.xlu0.b32.cont [14/16] 0.0, 128
    %54 = vxpose.xlu0.b32.cont [15/16] 0.0, 128
    %55 = vxpose.xlu0.b32.end [16/16] 0.0, 128
    %v56 = vpop.trf.xlu0
    %v57 = vpop.trf.xlu0
    %v58 = vpop.trf.xlu0
    %v59 = vpop.trf.xlu0
    %v60 = vpop.trf.xlu0
    %v61 = vpop.trf.xlu0
    %v62 = vpop.trf.xlu0
    %v63 = vpop.trf.xlu0
    %v64 = vpop.trf.xlu0
    %v65 = vpop.trf.xlu0
    %v66 = vpop.trf.xlu0
    %v67 = vpop.trf.xlu0
    %v68 = vpop.trf.xlu0
    %v69 = vpop.trf.xlu0
    %v70 = vpop.trf.xlu0
    %v71 = vpop.trf.xlu0
    %vm72 = vcmask 261120
    %v74 = vsel %vm72, %v56, 0
    %v77 = vsel %vm72, %v57, 0
    %79 = vmatprep.subr.mxu0 0.0
    %80 = vmatpush1.msra.mxu0 %v30
    %81 = vmatprep.subr.mxu0 0.0
    %82 = vmatpush1.msra.mxu0 %v31
    %83 = vmatprep.subr.mxu0 0.0
    %84 = vmatpush1.msra.mxu0 %v32
    %85 = vmatprep.subr.mxu0 0.0
    %86 = vmatpush1.msra.mxu0 %v33
    %87 = vmatprep.subr.mxu0 0.0
    %88 = vmatpush1.msra.mxu0 0.0
    %89 = vmatprep.subr.mxu0 0.0
    %90 = vmatpush1.msra.mxu0 0.0
    %91 = vmatprep.subr.mxu0 0.0
    %92 = vmatpush1.msra.mxu0 0.0
    %93 = vmatprep.subr.mxu0 0.0
    %94 = vmatpush1.msra.mxu0 0.0
    %95 = vmatprep.subr.mxu0 0.0
    %96 = vmatpush1.msra.mxu0 0.0
    %97 = vmatprep.subr.mxu0 0.0
    %98 = vmatpush1.msra.mxu0 0.0
    %99 = vmatprep.subr.mxu0 0.0
    %100 = vmatpush1.msra.mxu0 0.0
    %101 = vmatprep.subr.mxu0 0.0
    %102 = vmatpush1.msra.mxu0 0.0
    %103 = vmatprep.subr.mxu0 0.0
    %104 = vmatpush1.msra.mxu0 0.0
    %105 = vmatprep.subr.mxu0 0.0
    %106 = vmatpush1.msra.mxu0 0.0
    %107 = vmatprep.subr.mxu0 0.0
    %108 = vmatpush1.msra.mxu0 0.0
    %109 = vmatprep.subr.mxu0 0.0
    %110 = vmatpush1.msra.mxu0 0.0
    %111 = vmatprep.subr.mxu0 0.0
    %112 = vmatpush1.msra.mxu0 0.0
    %113 = vmatprep.subr.mxu0 0.0
    %114 = vmatpush1.msra.mxu0 0.0
    %115 = vmatprep.subr.mxu0 0.0
    %116 = vmatpush1.msra.mxu0 0.0
    %117 = vmatprep.subr.mxu0 0.0
    %118 = vmatpush1.msra.mxu0 0.0
    %119 = vmatprep.subr.mxu0 0.0
    %120 = vmatpush1.msra.mxu0 0.0
    %121 = vmatprep.subr.mxu0 0.0
    %122 = vmatpush1.msra.mxu0 0.0
    %123 = vmatprep.subr.mxu0 0.0
    %124 = vmatpush1.msra.mxu0 0.0
    %125 = vmatprep.subr.mxu0 0.0
    %126 = vmatpush1.msra.mxu0 0.0
    %127 = vmatprep.subr.mxu0 0.0
    %128 = vmatpush1.msra.mxu0 0.0
    %129 = vmatprep.subr.mxu0 0.0
    %130 = vmatpush1.msra.mxu0 0.0
    %131 = vmatprep.subr.mxu0 0.0
    %132 = vmatpush1.msra.mxu0 0.0
    %133 = vmatprep.subr.mxu0 0.0
    %134 = vmatpush1.msra.mxu0 0.0
    %135 = vmatprep.subr.mxu0 0.0
    %136 = vmatpush1.msra.mxu0 0.0
    %137 = vmatprep.subr.mxu0 0.0
    %138 = vmatpush1.msra.mxu0 0.0
    %139 = vmatprep.subr.mxu0 0.0
    %140 = vmatpush1.msra.mxu0 0.0
    %141 = vmatprep.subr.mxu0 0.0
    %142 = vmatpush1.msra.mxu0 0.0
    %143 = vmatprep.mubr.f32.mxu0 0.0
    %144 = vmatmul.mubr.f32.gmra.mrb[0].mxu0 %v74
    %v145 = vpop.f32.mrb[0].mxu0
    %v146 = vadd.f32 0.0, %v145
    %v147 = vpop.f32.mrb[0].mxu0
    %148 = vmatprep.mubr.f32.mxu0 0.0
    %149 = vmatmul.mubr.f32.gmra.mrb[0].mxu0 %v77
    %v150 = vpop.f32.mrb[0].mxu0
    %v151 = vadd.f32 0.0, %v150
    %v152 = vpop.f32.mrb[0].mxu0
    %153 = vdwg.mxu0
    %v154 = vadd.f32 %v38, %v146
    %v155 = vadd.f32 %v39, %v151
    %vm156 = vcmask 130048
    %157 = vst.msk [vmem:[#allocation4] sm:$0xff] %vm156, %v154
    %158 = vst.msk [vmem:[#allocation4 + $0x8] sm:$0xff] %vm156, %v155
    %v159 = vld [vmem:[#allocation6] sm:$0xff]
    %v160 = vld [vmem:[#allocation6 + $0x8] sm:$0xff]
    %161 = vxpose.xlu0.b32.start [1/16] %v34, 128
    %162 = vxpose.xlu0.b32.cont [2/16] %v35, 128
    %163 = vxpose.xlu0.b32.cont [3/16] %v36, 128
    %164 = vxpose.xlu0.b32.cont [4/16] %v37, 128
    %165 = vxpose.xlu0.b32.cont [5/16] 0.0, 128
    %166 = vxpose.xlu0.b32.cont [6/16] 0.0, 128
    %167 = vxpose.xlu0.b32.cont [7/16] 0.0, 128
    %168 = vxpose.xlu0.b32.cont [8/16] 0.0, 128
    %169 = vxpose.xlu0.b32.cont [9/16] 0.0, 128
    %170 = vxpose.xlu0.b32.cont [10/16] 0.0, 128
    %171 = vxpose.xlu0.b32.cont [11/16] 0.0, 128
    %172 = vxpose.xlu0.b32.cont [12/16] 0.0, 128
    %173 = vxpose.xlu0.b32.cont [13/16] 0.0, 128
    %174 = vxpose.xlu0.b32.cont [14/16] 0.0, 128
    %175 = vxpose.xlu0.b32.cont [15/16] 0.0, 128
    %176 = vxpose.xlu0.b32.end [16/16] 0.0, 128
    %v177 = vpop.trf.xlu0
    %v178 = vpop.trf.xlu0
    %v179 = vpop.trf.xlu0
    %v180 = vpop.trf.xlu0
    %v181 = vpop.trf.xlu0
    %v182 = vpop.trf.xlu0
    %v183 = vpop.trf.xlu0
    %v184 = vpop.trf.xlu0
    %v185 = vpop.trf.xlu0
    %v186 = vpop.trf.xlu0
    %v187 = vpop.trf.xlu0
    %v188 = vpop.trf.xlu0
    %v189 = vpop.trf.xlu0
    %v190 = vpop.trf.xlu0
    %v191 = vpop.trf.xlu0
    %v192 = vpop.trf.xlu0
    %v194 = vsel %vm72, %v177, 0
    %v197 = vsel %vm72, %v178, 0
    %199 = vmatprep.subr.mxu0 0.0
    %200 = vmatpush1.msra.mxu0 %v34
    %201 = vmatprep.subr.mxu0 0.0
    %202 = vmatpush1.msra.mxu0 %v35
    %203 = vmatprep.subr.mxu0 0.0
    %204 = vmatpush1.msra.mxu0 %v36
    %205 = vmatprep.subr.mxu0 0.0
    %206 = vmatpush1.msra.mxu0 %v37
    %207 = vmatprep.subr.mxu0 0.0
    %208 = vmatpush1.msra.mxu0 0.0
    %209 = vmatprep.subr.mxu0 0.0
    %210 = vmatpush1.msra.mxu0 0.0
    %211 = vmatprep.subr.mxu0 0.0
    %212 = vmatpush1.msra.mxu0 0.0
    %213 = vmatprep.subr.mxu0 0.0
    %214 = vmatpush1.msra.mxu0 0.0
    %215 = vmatprep.subr.mxu0 0.0
    %216 = vmatpush1.msra.mxu0 0.0
    %217 = vmatprep.subr.mxu0 0.0
    %218 = vmatpush1.msra.mxu0 0.0
    %219 = vmatprep.subr.mxu0 0.0
    %220 = vmatpush1.msra.mxu0 0.0
    %221 = vmatprep.subr.mxu0 0.0
    %222 = vmatpush1.msra.mxu0 0.0
    %223 = vmatprep.subr.mxu0 0.0
    %224 = vmatpush1.msra.mxu0 0.0
    %225 = vmatprep.subr.mxu0 0.0
    %226 = vmatpush1.msra.mxu0 0.0
    %227 = vmatprep.subr.mxu0 0.0
    %228 = vmatpush1.msra.mxu0 0.0
    %229 = vmatprep.subr.mxu0 0.0
    %230 = vmatpush1.msra.mxu0 0.0
    %231 = vmatprep.subr.mxu0 0.0
    %232 = vmatpush1.msra.mxu0 0.0
    %233 = vmatprep.subr.mxu0 0.0
    %234 = vmatpush1.msra.mxu0 0.0
    %235 = vmatprep.subr.mxu0 0.0
    %236 = vmatpush1.msra.mxu0 0.0
    %237 = vmatprep.subr.mxu0 0.0
    %238 = vmatpush1.msra.mxu0 0.0
    %239 = vmatprep.subr.mxu0 0.0
    %240 = vmatpush1.msra.mxu0 0.0
    %241 = vmatprep.subr.mxu0 0.0
    %242 = vmatpush1.msra.mxu0 0.0
    %243 = vmatprep.subr.mxu0 0.0
    %244 = vmatpush1.msra.mxu0 0.0
    %245 = vmatprep.subr.mxu0 0.0
    %246 = vmatpush1.msra.mxu0 0.0
    %247 = vmatprep.subr.mxu0 0.0
    %248 = vmatpush1.msra.mxu0 0.0
    %249 = vmatprep.subr.mxu0 0.0
    %250 = vmatpush1.msra.mxu0 0.0
    %251 = vmatprep.subr.mxu0 0.0
    %252 = vmatpush1.msra.mxu0 0.0
    %253 = vmatprep.subr.mxu0 0.0
    %254 = vmatpush1.msra.mxu0 0.0
    %255 = vmatprep.subr.mxu0 0.0
    %256 = vmatpush1.msra.mxu0 0.0
    %257 = vmatprep.subr.mxu0 0.0
    %258 = vmatpush1.msra.mxu0 0.0
    %259 = vmatprep.subr.mxu0 0.0
    %260 = vmatpush1.msra.mxu0 0.0
    %261 = vmatprep.subr.mxu0 0.0
    %262 = vmatpush1.msra.mxu0 0.0
    %263 = vmatprep.mubr.f32.mxu0 0.0
    %264 = vmatmul.mubr.f32.gmra.mrb[0].mxu0 %v194
    %v265 = vpop.f32.mrb[0].mxu0
    %v266 = vadd.f32 0.0, %v265
    %v267 = vpop.f32.mrb[0].mxu0
    %268 = vmatprep.mubr.f32.mxu0 0.0
    %269 = vmatmul.mubr.f32.gmra.mrb[0].mxu0 %v197
    %v270 = vpop.f32.mrb[0].mxu0
    %v271 = vadd.f32 0.0, %v270
    %v272 = vpop.f32.mrb[0].mxu0
    %273 = vdwg.mxu0
    %v274 = vadd.f32 %v159, %v266
    %v275 = vadd.f32 %v160, %v271
    %276 = vst.msk [vmem:[#allocation6] sm:$0xff] %vm156, %v274
    %277 = vst.msk [vmem:[#allocation6 + $0x8] sm:$0xff] %vm156, %v275
    %v278 = vld [vmem:[#allocation8] sm:$0xff]
    %v279 = vld [vmem:[#allocation8 + $0x8] sm:$0xff]
    %280 = vmatprep.subr.mxu0 0.0
    %281 = vmatpush1.msra.mxu0 %v34
    %282 = vmatprep.subr.mxu0 0.0
    %283 = vmatpush1.msra.mxu0 %v35
    %284 = vmatprep.subr.mxu0 0.0
    %285 = vmatpush1.msra.mxu0 %v36
    %286 = vmatprep.subr.mxu0 0.0
    %287 = vmatpush1.msra.mxu0 %v37
    %288 = vmatprep.subr.mxu0 0.0
    %289 = vmatpush1.msra.mxu0 0.0
    %290 = vmatprep.subr.mxu0 0.0
    %291 = vmatpush1.msra.mxu0 0.0
    %292 = vmatprep.subr.mxu0 0.0
    %293 = vmatpush1.msra.mxu0 0.0
    %294 = vmatprep.subr.mxu0 0.0
    %295 = vmatpush1.msra.mxu0 0.0
    %296 = vmatprep.subr.mxu0 0.0
    %297 = vmatpush1.msra.mxu0 0.0
    %298 = vmatprep.subr.mxu0 0.0
    %299 = vmatpush1.msra.mxu0 0.0
    %300 = vmatprep.subr.mxu0 0.0
    %301 = vmatpush1.msra.mxu0 0.0
    %302 = vmatprep.subr.mxu0 0.0
    %303 = vmatpush1.msra.mxu0 0.0
    %304 = vmatprep.subr.mxu0 0.0
    %305 = vmatpush1.msra.mxu0 0.0
    %306 = vmatprep.subr.mxu0 0.0
    %307 = vmatpush1.msra.mxu0 0.0
    %308 = vmatprep.subr.mxu0 0.0
    %309 = vmatpush1.msra.mxu0 0.0
    %310 = vmatprep.subr.mxu0 0.0
    %311 = vmatpush1.msra.mxu0 0.0
    %312 = vmatprep.subr.mxu0 0.0
    %313 = vmatpush1.msra.mxu0 0.0
    %314 = vmatprep.subr.mxu0 0.0
    %315 = vmatpush1.msra.mxu0 0.0
    %316 = vmatprep.subr.mxu0 0.0
    %317 = vmatpush1.msra.mxu0 0.0
    %318 = vmatprep.subr.mxu0 0.0
    %319 = vmatpush1.msra.mxu0 0.0
    %320 = vmatprep.subr.mxu0 0.0
    %321 = vmatpush1.msra.mxu0 0.0
    %322 = vmatprep.subr.mxu0 0.0
    %323 = vmatpush1.msra.mxu0 0.0
    %324 = vmatprep.subr.mxu0 0.0
    %325 = vmatpush1.msra.mxu0 0.0
    %326 = vmatprep.subr.mxu0 0.0
    %327 = vmatpush1.msra.mxu0 0.0
    %328 = vmatprep.subr.mxu0 0.0
    %329 = vmatpush1.msra.mxu0 0.0
    %330 = vmatprep.subr.mxu0 0.0
    %331 = vmatpush1.msra.mxu0 0.0
    %332 = vmatprep.subr.mxu0 0.0
    %333 = vmatpush1.msra.mxu0 0.0
    %334 = vmatprep.subr.mxu0 0.0
    %335 = vmatpush1.msra.mxu0 0.0
    %336 = vmatprep.subr.mxu0 0.0
    %337 = vmatpush1.msra.mxu0 0.0
    %338 = vmatprep.subr.mxu0 0.0
    %339 = vmatpush1.msra.mxu0 0.0
    %340 = vmatprep.subr.mxu0 0.0
    %341 = vmatpush1.msra.mxu0 0.0
    %342 = vmatprep.subr.mxu0 0.0
    %343 = vmatpush1.msra.mxu0 0.0
    %344 = vmatprep.mubr.f32.mxu0 0.0
    %345 = vmatmul.mubr.f32.gmra.mrb[0].mxu0 %v74
    %v346 = vpop.f32.mrb[0].mxu0
    %v347 = vadd.f32 0.0, %v346
    %v348 = vpop.f32.mrb[0].mxu0
    %349 = vmatprep.mubr.f32.mxu0 0.0
    %350 = vmatmul.mubr.f32.gmra.mrb[0].mxu0 %v77
    %v351 = vpop.f32.mrb[0].mxu0
    %v352 = vadd.f32 0.0, %v351
    %v353 = vpop.f32.mrb[0].mxu0
    %354 = vdwg.mxu0
    %v355 = vadd.f32 %v278, %v347
    %v356 = vadd.f32 %v279, %v352
    %357 = vst.msk [vmem:[#allocation8] sm:$0xff] %vm156, %v355
    %358 = vst.msk [vmem:[#allocation8 + $0x8] sm:$0xff] %vm156, %v356
    %v359 = vld [vmem:[#allocation2] sm:$0x1]
    %v360 = vsel %vm156, %v30, 0.0
    %v361 = vsel %vm156, %v31, 0.0
    %v362 = vadd.f32 %v360, %v361
    %v363 = vsel %vm156, %v32, 0.0
    %v364 = vadd.f32 %v362, %v363
    %v365 = vsel %vm156, %v33, 0.0
    %v366 = vadd.f32 %v364, %v365
    %v367 = vrot.slane %v366, 4
    %v368 = vadd.f32 %v366, %v367
    %v369 = vrot.slane %v368, 2
    %v370 = vadd.f32 %v368, %v369
    %v371 = vrot.slane %v370, 1
    %v372 = vadd.f32 %v370, %v371
    %v373 = vadd.f32 %v359, %v372
    %vm374 = vcmask 122880
    %375 = vst.msk [vmem:[#allocation2] sm:$0x1] %vm374, %v373
    %v376 = vld [vmem:[#allocation3] sm:$0x1]
    %v377 = vsel %vm156, %v34, 0.0
    %v378 = vsel %vm156, %v35, 0.0
    %v379 = vadd.f32 %v377, %v378
    %v380 = vsel %vm156, %v36, 0.0
    %v381 = vadd.f32 %v379, %v380
    %v382 = vsel %vm156, %v37, 0.0
    %v383 = vadd.f32 %v381, %v382
    %v384 = vrot.slane %v383, 4
    %v385 = vadd.f32 %v383, %v384
    %v386 = vrot.slane %v385, 2
    %v387 = vadd.f32 %v385, %v386
    %v388 = vrot.slane %v387, 1
    %v389 = vadd.f32 %v387, %v388
    %v390 = vadd.f32 %v376, %v389
    %391 = vst.msk [vmem:[#allocation3] sm:$0x1] %vm374, %v390
    // Predicated region
    $region14: #{tpu_custom_call.1} parent=1 // pred_check
      %p392 = pneg %p16
    $region15: #{tpu_custom_call.1} parent=1 // pred_check_branch
      %394 = sbr.rel (%p392) target = $region17
    $region16: #{tpu_custom_call.1} parent=1 // pred_region
      %v395 = vld [vmem:[#allocation2] sm:$0x1]
      %v396 = vld [vmem:[#allocation3] sm:$0x1]
      %v397 = vmul.f32 %v395, 0.03125
      %v398 = vmul.f32 %v396, 0.03125
      %399 = vxpose.xlu0.b32.start [1/16] %v395, 128
      %400 = vxpose.xlu0.b32.cont [2/16] 0.0, 128
      %401 = vxpose.xlu0.b32.cont [3/16] 0.0, 128
      %402 = vxpose.xlu0.b32.cont [4/16] 0.0, 128
      %403 = vxpose.xlu0.b32.cont [5/16] 0.0, 128
      %404 = vxpose.xlu0.b32.cont [6/16] 0.0, 128
      %405 = vxpose.xlu0.b32.cont [7/16] 0.0, 128
      %406 = vxpose.xlu0.b32.cont [8/16] 0.0, 128
      %407 = vxpose.xlu0.b32.cont [9/16] 0.0, 128
      %408 = vxpose.xlu0.b32.cont [10/16] 0.0, 128
      %409 = vxpose.xlu0.b32.cont [11/16] 0.0, 128
      %410 = vxpose.xlu0.b32.cont [12/16] 0.0, 128
      %411 = vxpose.xlu0.b32.cont [13/16] 0.0, 128
      %412 = vxpose.xlu0.b32.cont [14/16] 0.0, 128
      %413 = vxpose.xlu0.b32.cont [15/16] 0.0, 128
      %414 = vxpose.xlu0.b32.end [16/16] 0.0, 128
      %v415 = vpop.trf.xlu0
      %v416 = vpop.trf.xlu0
      %v417 = vpop.trf.xlu0
      %v418 = vpop.trf.xlu0
      %v419 = vpop.trf.xlu0
      %v420 = vpop.trf.xlu0
      %v421 = vpop.trf.xlu0
      %v422 = vpop.trf.xlu0
      %v423 = vpop.trf.xlu0
      %v424 = vpop.trf.xlu0
      %v425 = vpop.trf.xlu0
      %v426 = vpop.trf.xlu0
      %v427 = vpop.trf.xlu0
      %v428 = vpop.trf.xlu0
      %v429 = vpop.trf.xlu0
      %v430 = vpop.trf.xlu0
      %vm431 = vcmask 7168
      %v433 = vsel %vm431, %v415, 0
      %v436 = vsel %vm431, %v416, 0
      %vm438 = vcmask 1040384
      %v440 = vsel %vm438, %v397, 0
      %442 = vmatprep.subr.mxu0 0.0
      %443 = vmatpush1.msra.mxu0 %v440
      %444 = vmatprep.subr.mxu0 0.0
      %445 = vmatpush1.msra.mxu0 0.0
      %446 = vmatprep.subr.mxu0 0.0
      %447 = vmatpush1.msra.mxu0 0.0
      %448 = vmatprep.subr.mxu0 0.0
      %449 = vmatpush1.msra.mxu0 0.0
      %450 = vmatprep.subr.mxu0 0.0
      %451 = vmatpush1.msra.mxu0 0.0
      %452 = vmatprep.subr.mxu0 0.0
      %453 = vmatpush1.msra.mxu0 0.0
      %454 = vmatprep.subr.mxu0 0.0
      %455 = vmatpush1.msra.mxu0 0.0
      %456 = vmatprep.subr.mxu0 0.0
      %457 = vmatpush1.msra.mxu0 0.0
      %458 = vmatprep.subr.mxu0 0.0
      %459 = vmatpush1.msra.mxu0 0.0
      %460 = vmatprep.subr.mxu0 0.0
      %461 = vmatpush1.msra.mxu0 0.0
      %462 = vmatprep.subr.mxu0 0.0
      %463 = vmatpush1.msra.mxu0 0.0
      %464 = vmatprep.subr.mxu0 0.0
      %465 = vmatpush1.msra.mxu0 0.0
      %466 = vmatprep.subr.mxu0 0.0
      %467 = vmatpush1.msra.mxu0 0.0
      %468 = vmatprep.subr.mxu0 0.0
      %469 = vmatpush1.msra.mxu0 0.0
      %470 = vmatprep.subr.mxu0 0.0
      %471 = vmatpush1.msra.mxu0 0.0
      %472 = vmatprep.subr.mxu0 0.0
      %473 = vmatpush1.msra.mxu0 0.0
      %474 = vmatprep.subr.mxu0 0.0
      %475 = vmatpush1.msra.mxu0 0.0
      %476 = vmatprep.subr.mxu0 0.0
      %477 = vmatpush1.msra.mxu0 0.0
      %478 = vmatprep.subr.mxu0 0.0
      %479 = vmatpush1.msra.mxu0 0.0
      %480 = vmatprep.subr.mxu0 0.0
      %481 = vmatpush1.msra.mxu0 0.0
      %482 = vmatprep.subr.mxu0 0.0
      %483 = vmatpush1.msra.mxu0 0.0
      %484 = vmatprep.subr.mxu0 0.0
      %485 = vmatpush1.msra.mxu0 0.0
      %486 = vmatprep.subr.mxu0 0.0
      %487 = vmatpush1.msra.mxu0 0.0
      %488 = vmatprep.subr.mxu0 0.0
      %489 = vmatpush1.msra.mxu0 0.0
      %490 = vmatprep.subr.mxu0 0.0
      %491 = vmatpush1.msra.mxu0 0.0
      %492 = vmatprep.subr.mxu0 0.0
      %493 = vmatpush1.msra.mxu0 0.0
      %494 = vmatprep.subr.mxu0 0.0
      %495 = vmatpush1.msra.mxu0 0.0
      %496 = vmatprep.subr.mxu0 0.0
      %497 = vmatpush1.msra.mxu0 0.0
      %498 = vmatprep.subr.mxu0 0.0
      %499 = vmatpush1.msra.mxu0 0.0
      %500 = vmatprep.subr.mxu0 0.0
      %501 = vmatpush1.msra.mxu0 0.0
      %502 = vmatprep.subr.mxu0 0.0
      %503 = vmatpush1.msra.mxu0 0.0
      %504 = vmatprep.subr.mxu0 0.0
      %505 = vmatpush1.msra.mxu0 0.0
      %506 = vmatprep.mubr.f32.mxu0 0.0
      %507 = vmatmul.mubr.f32.gmra.mrb[0].mxu0 %v433
      %v508 = vpop.f32.mrb[0].mxu0
      %v509 = vadd.f32 0.0, %v508
      %v510 = vpop.f32.mrb[0].mxu0
      %511 = vmatprep.mubr.f32.mxu0 0.0
      %512 = vmatmul.mubr.f32.gmra.mrb[0].mxu0 %v436
      %v513 = vpop.f32.mrb[0].mxu0
      %v514 = vadd.f32 0.0, %v513
      %v515 = vpop.f32.mrb[0].mxu0
      %516 = vdwg.mxu0
      %517 = vxpose.xlu0.b32.start [1/16] %v396, 128
      %518 = vxpose.xlu0.b32.cont [2/16] 0.0, 128
      %519 = vxpose.xlu0.b32.cont [3/16] 0.0, 128
      %520 = vxpose.xlu0.b32.cont [4/16] 0.0, 128
      %521 = vxpose.xlu0.b32.cont [5/16] 0.0, 128
      %522 = vxpose.xlu0.b32.cont [6/16] 0.0, 128
      %523 = vxpose.xlu0.b32.cont [7/16] 0.0, 128
      %524 = vxpose.xlu0.b32.cont [8/16] 0.0, 128
      %525 = vxpose.xlu0.b32.cont [9/16] 0.0, 128
      %526 = vxpose.xlu0.b32.cont [10/16] 0.0, 128
      %527 = vxpose.xlu0.b32.cont [11/16] 0.0, 128
      %528 = vxpose.xlu0.b32.cont [12/16] 0.0, 128
      %529 = vxpose.xlu0.b32.cont [13/16] 0.0, 128
      %530 = vxpose.xlu0.b32.cont [14/16] 0.0, 128
      %531 = vxpose.xlu0.b32.cont [15/16] 0.0, 128
      %532 = vxpose.xlu0.b32.end [16/16] 0.0, 128
      %v533 = vpop.trf.xlu0
      %v534 = vpop.trf.xlu0
      %v535 = vpop.trf.xlu0
      %v536 = vpop.trf.xlu0
      %v537 = vpop.trf.xlu0
      %v538 = vpop.trf.xlu0
      %v539 = vpop.trf.xlu0
      %v540 = vpop.trf.xlu0
      %v541 = vpop.trf.xlu0
      %v542 = vpop.trf.xlu0
      %v543 = vpop.trf.xlu0
      %v544 = vpop.trf.xlu0
      %v545 = vpop.trf.xlu0
      %v546 = vpop.trf.xlu0
      %v547 = vpop.trf.xlu0
      %v548 = vpop.trf.xlu0
      %v550 = vsel %vm431, %v533, 0
      %v553 = vsel %vm431, %v534, 0
      %v556 = vsel %vm438, %v398, 0
      %558 = vmatprep.subr.mxu0 0.0
      %559 = vmatpush1.msra.mxu0 %v556
      %560 = vmatprep.subr.mxu0 0.0
      %561 = vmatpush1.msra.mxu0 0.0
      %562 = vmatprep.subr.mxu0 0.0
      %563 = vmatpush1.msra.mxu0 0.0
      %564 = vmatprep.subr.mxu0 0.0
      %565 = vmatpush1.msra.mxu0 0.0
      %566 = vmatprep.subr.mxu0 0.0
      %567 = vmatpush1.msra.mxu0 0.0
      %568 = vmatprep.subr.mxu0 0.0
      %569 = vmatpush1.msra.mxu0 0.0
      %570 = vmatprep.subr.mxu0 0.0
      %571 = vmatpush1.msra.mxu0 0.0
      %572 = vmatprep.subr.mxu0 0.0
      %573 = vmatpush1.msra.mxu0 0.0
      %574 = vmatprep.subr.mxu0 0.0
      %575 = vmatpush1.msra.mxu0 0.0
      %576 = vmatprep.subr.mxu0 0.0
      %577 = vmatpush1.msra.mxu0 0.0
      %578 = vmatprep.subr.mxu0 0.0
      %579 = vmatpush1.msra.mxu0 0.0
      %580 = vmatprep.subr.mxu0 0.0
      %581 = vmatpush1.msra.mxu0 0.0
      %582 = vmatprep.subr.mxu0 0.0
      %583 = vmatpush1.msra.mxu0 0.0
      %584 = vmatprep.subr.mxu0 0.0
      %585 = vmatpush1.msra.mxu0 0.0
      %586 = vmatprep.subr.mxu0 0.0
      %587 = vmatpush1.msra.mxu0 0.0
      %588 = vmatprep.subr.mxu0 0.0
      %589 = vmatpush1.msra.mxu0 0.0
      %590 = vmatprep.subr.mxu0 0.0
      %591 = vmatpush1.msra.mxu0 0.0
      %592 = vmatprep.subr.mxu0 0.0
      %593 = vmatpush1.msra.mxu0 0.0
      %594 = vmatprep.subr.mxu0 0.0
      %595 = vmatpush1.msra.mxu0 0.0
      %596 = vmatprep.subr.mxu0 0.0
      %597 = vmatpush1.msra.mxu0 0.0
      %598 = vmatprep.subr.mxu0 0.0
      %599 = vmatpush1.msra.mxu0 0.0
      %600 = vmatprep.subr.mxu0 0.0
      %601 = vmatpush1.msra.mxu0 0.0
      %602 = vmatprep.subr.mxu0 0.0
      %603 = vmatpush1.msra.mxu0 0.0
      %604 = vmatprep.subr.mxu0 0.0
      %605 = vmatpush1.msra.mxu0 0.0
      %606 = vmatprep.subr.mxu0 0.0
      %607 = vmatpush1.msra.mxu0 0.0
      %608 = vmatprep.subr.mxu0 0.0
      %609 = vmatpush1.msra.mxu0 0.0
      %610 = vmatprep.subr.mxu0 0.0
      %611 = vmatpush1.msra.mxu0 0.0
      %612 = vmatprep.subr.mxu0 0.0
      %613 = vmatpush1.msra.mxu0 0.0
      %614 = vmatprep.subr.mxu0 0.0
      %615 = vmatpush1.msra.mxu0 0.0
      %616 = vmatprep.subr.mxu0 0.0
      %617 = vmatpush1.msra.mxu0 0.0
      %618 = vmatprep.subr.mxu0 0.0
      %619 = vmatpush1.msra.mxu0 0.0
      %620 = vmatprep.subr.mxu0 0.0
      %621 = vmatpush1.msra.mxu0 0.0
      %622 = vmatprep.mubr.f32.mxu0 0.0
      %623 = vmatmul.mubr.f32.gmra.mrb[0].mxu0 %v550
      %v624 = vpop.f32.mrb[0].mxu0
      %v625 = vadd.f32 0.0, %v624
      %v626 = vpop.f32.mrb[0].mxu0
      %627 = vmatprep.mubr.f32.mxu0 0.0
      %628 = vmatmul.mubr.f32.gmra.mrb[0].mxu0 %v553
      %v629 = vpop.f32.mrb[0].mxu0
      %v630 = vadd.f32 0.0, %v629
      %v631 = vpop.f32.mrb[0].mxu0
      %632 = vdwg.mxu0
      %633 = vmatprep.subr.mxu0 0.0
      %634 = vmatpush1.msra.mxu0 %v556
      %635 = vmatprep.subr.mxu0 0.0
      %636 = vmatpush1.msra.mxu0 0.0
      %637 = vmatprep.subr.mxu0 0.0
      %638 = vmatpush1.msra.mxu0 0.0
      %639 = vmatprep.subr.mxu0 0.0
      %640 = vmatpush1.msra.mxu0 0.0
      %641 = vmatprep.subr.mxu0 0.0
      %642 = vmatpush1.msra.mxu0 0.0
      %643 = vmatprep.subr.mxu0 0.0
      %644 = vmatpush1.msra.mxu0 0.0
      %645 = vmatprep.subr.mxu0 0.0
      %646 = vmatpush1.msra.mxu0 0.0
      %647 = vmatprep.subr.mxu0 0.0
      %648 = vmatpush1.msra.mxu0 0.0
      %649 = vmatprep.subr.mxu0 0.0
      %650 = vmatpush1.msra.mxu0 0.0
      %651 = vmatprep.subr.mxu0 0.0
      %652 = vmatpush1.msra.mxu0 0.0
      %653 = vmatprep.subr.mxu0 0.0
      %654 = vmatpush1.msra.mxu0 0.0
      %655 = vmatprep.subr.mxu0 0.0
      %656 = vmatpush1.msra.mxu0 0.0
      %657 = vmatprep.subr.mxu0 0.0
      %658 = vmatpush1.msra.mxu0 0.0
      %659 = vmatprep.subr.mxu0 0.0
      %660 = vmatpush1.msra.mxu0 0.0
      %661 = vmatprep.subr.mxu0 0.0
      %662 = vmatpush1.msra.mxu0 0.0
      %663 = vmatprep.subr.mxu0 0.0
      %664 = vmatpush1.msra.mxu0 0.0
      %665 = vmatprep.subr.mxu0 0.0
      %666 = vmatpush1.msra.mxu0 0.0
      %667 = vmatprep.subr.mxu0 0.0
      %668 = vmatpush1.msra.mxu0 0.0
      %669 = vmatprep.subr.mxu0 0.0
      %670 = vmatpush1.msra.mxu0 0.0
      %671 = vmatprep.subr.mxu0 0.0
      %672 = vmatpush1.msra.mxu0 0.0
      %673 = vmatprep.subr.mxu0 0.0
      %674 = vmatpush1.msra.mxu0 0.0
      %675 = vmatprep.subr.mxu0 0.0
      %676 = vmatpush1.msra.mxu0 0.0
      %677 = vmatprep.subr.mxu0 0.0
      %678 = vmatpush1.msra.mxu0 0.0
      %679 = vmatprep.subr.mxu0 0.0
      %680 = vmatpush1.msra.mxu0 0.0
      %681 = vmatprep.subr.mxu0 0.0
      %682 = vmatpush1.msra.mxu0 0.0
      %683 = vmatprep.subr.mxu0 0.0
      %684 = vmatpush1.msra.mxu0 0.0
      %685 = vmatprep.subr.mxu0 0.0
      %686 = vmatpush1.msra.mxu0 0.0
      %687 = vmatprep.subr.mxu0 0.0
      %688 = vmatpush1.msra.mxu0 0.0
      %689 = vmatprep.subr.mxu0 0.0
      %690 = vmatpush1.msra.mxu0 0.0
      %691 = vmatprep.subr.mxu0 0.0
      %692 = vmatpush1.msra.mxu0 0.0
      %693 = vmatprep.subr.mxu0 0.0
      %694 = vmatpush1.msra.mxu0 0.0
      %695 = vmatprep.subr.mxu0 0.0
      %696 = vmatpush1.msra.mxu0 0.0
      %697 = vmatprep.mubr.f32.mxu0 0.0
      %698 = vmatmul.mubr.f32.gmra.mrb[0].mxu0 %v433
      %v699 = vpop.f32.mrb[0].mxu0
      %v700 = vadd.f32 0.0, %v699
      %v701 = vpop.f32.mrb[0].mxu0
      %702 = vmatprep.mubr.f32.mxu0 0.0
      %703 = vmatmul.mubr.f32.gmra.mrb[0].mxu0 %v436
      %v704 = vpop.f32.mrb[0].mxu0
      %v705 = vadd.f32 0.0, %v704
      %v706 = vpop.f32.mrb[0].mxu0
      %707 = vdwg.mxu0
      %v708 = vlaneseq
      %v709 = vshrl.u32 %v708, 7
      %v710 = vadd.s32 %v709, 8
      %v711 = vlaneseq
      %v712 = vand.u32 %v711, 127
      %vm713 = vcmp.eq.s32.totalorder %v709, %v712
      %vm714 = vcmp.eq.s32.totalorder %v710, %v712
      %v715 = vld [vmem:[#allocation4] sm:$0xff]
      %v716 = vld [vmem:[#allocation4 + $0x8] sm:$0xff]
      %v717 = vsub.f32 %v715, %v509
      %v718 = vsub.f32 %v716, %v514
      %v719 = vmul.f32 %v717, 0.032258064
      %v720 = vmul.f32 %v718, 0.032258064
      %v721 = vld [vmem:[#allocation6] sm:$0xff]
      %v722 = vld [vmem:[#allocation6 + $0x8] sm:$0xff]
      %v723 = vsub.f32 %v721, %v625
      %v724 = vsub.f32 %v722, %v630
      %v725 = vmul.f32 %v723, 0.032258064
      %v726 = vmul.f32 %v724, 0.032258064
      %v727 = vadd.f32 %v719, 0.001
      %v728 = vadd.f32 %v720, 0.001
      %v729 = vsel %vm713, %v727, %v719
      %v730 = vsel %vm714, %v728, %v720
      %731 = vst.msk [vmem:[#allocation4] sm:$0xff] %vm156, %v729
      %732 = vst.msk [vmem:[#allocation4 + $0x8] sm:$0xff] %vm156, %v730
      %v733 = vadd.f32 %v725, 0.001
      %v734 = vadd.f32 %v726, 0.001
      %v735 = vsel %vm713, %v733, %v725
      %v736 = vsel %vm714, %v734, %v726
      %737 = vst.msk [vmem:[#allocation6] sm:$0xff] %vm156, %v735
      %738 = vst.msk [vmem:[#allocation6 + $0x8] sm:$0xff] %vm156, %v736
      %v739 = vld [vmem:[#allocation8] sm:$0xff]
      %v740 = vld [vmem:[#allocation8 + $0x8] sm:$0xff]
      %v741 = vsub.f32 %v739, %v700
      %v742 = vsub.f32 %v740, %v705
      %v743 = vmul.f32 %v741, 0.032258064
      %v744 = vmul.f32 %v742, 0.032258064
      %745 = vst.msk [vmem:[#allocation8] sm:$0xff] %vm156, %v743
      %746 = vst.msk [vmem:[#allocation8 + $0x8] sm:$0xff] %vm156, %v744
    $region17: #{tpu_custom_call.1} parent=1 // pred_fallthru
      _
    // Predicated region
    $region18: #{tpu_custom_call.1} parent=1 // pred_check
      _
    $region19: #{tpu_custom_call.1} parent=1 // pred_check_branch
      %748 = sbr.rel (0) target = $region21
    $region20: #{tpu_custom_call.1} parent=1 // pred_region
      %s750 = ssub.s32 256, 256
      %751 = vsyncadd [#allocation5], %s750
      %s752 = sshll.u32 [#allocation4], 4
      %s753 = int_to_ptr.vmem [resolvable:$true] %s752
      %758 = dma.vmem_to_hbm [thread:$0]  %s753, 256, %s2, [#allocation5], 128, 128, 8
    $region21: #{tpu_custom_call.1} parent=1 // pred_fallthru
      _
    // Predicated region
    $region22: #{tpu_custom_call.1} parent=1 // pred_check
      _
    $region23: #{tpu_custom_call.1} parent=1 // pred_check_branch
      %760 = sbr.rel (0) target = $region25
    $region24: #{tpu_custom_call.1} parent=1 // pred_region
      %s762 = ssub.s32 256, 256
      %763 = vsyncadd [#allocation7], %s762
      %s764 = sshll.u32 [#allocation6], 4
      %s765 = int_to_ptr.vmem [resolvable:$true] %s764
      %770 = dma.vmem_to_hbm [thread:$0]  %s765, 256, %s3, [#allocation7], 128, 128, 8
    $region25: #{tpu_custom_call.1} parent=1 // pred_fallthru
      _
    // Predicated region
    $region26: #{tpu_custom_call.1} parent=1 // pred_check
      _
    $region27: #{tpu_custom_call.1} parent=1 // pred_check_branch
      %772 = sbr.rel (0) target = $region29
    $region28: #{tpu_custom_call.1} parent=1 // pred_region
      %s774 = ssub.s32 256, 256
      %775 = vsyncadd [#allocation7], %s774
      %s776 = sshll.u32 [#allocation8], 4
      %s777 = int_to_ptr.vmem [resolvable:$true] %s776
      %782 = dma.vmem_to_hbm [thread:$0]  %s777, 256, %s4, [#allocation7], 128, 128, 8
    $region29: #{tpu_custom_call.1} parent=1 // pred_fallthru
      _
    // Predicated region
    $region30: #{tpu_custom_call.1} parent=1 // pred_check
      _
    $region31: #{tpu_custom_call.1} parent=1 // pred_check_branch
      %784 = sbr.rel (0) target = $region33
    $region32: #{tpu_custom_call.1} parent=1 // pred_region
      %785 = dma.done [#allocation5], 256
    $region33: #{tpu_custom_call.1} parent=1 // pred_fallthru
      _
    // Predicated region
    $region34: #{tpu_custom_call.1} parent=1 // pred_check
      _
    $region35: #{tpu_custom_call.1} parent=1 // pred_check_branch
      %787 = sbr.rel (0) target = $region37
    $region36: #{tpu_custom_call.1} parent=1 // pred_region
      %788 = dma.done [#allocation7], 256
    $region37: #{tpu_custom_call.1} parent=1 // pred_fallthru
      _
    // Predicated region
    $region38: #{tpu_custom_call.1} parent=1 // pred_check
      _
    $region39: #{tpu_custom_call.1} parent=1 // pred_check_branch
      %790 = sbr.rel (0) target = $region41
    $region40: #{tpu_custom_call.1} parent=1 // pred_region
      %791 = dma.done [#allocation7], 256
    $region41: #{tpu_custom_call.1} parent=1 // pred_fallthru
      _
    %792 = vsyncpa [#allocation5], 1
    %793 = vsyncpa [#allocation7], 1

</llo_original>
